<compile_context>
chip_gen: v7x
topology: tpu7x:2x2x1
jax: 0.10.0
libtpu: 0.0.40
codegen_flags: <defaults>
</compile_context>

<pallas_src>
import functools

import jax
import jax.numpy as jnp
from jax import lax
from jax.experimental import pallas as pl
from jax.experimental.pallas import tpu as pltpu


# -----------------------------------------------------------------------------
# Pallas kernel: fused "all-basis conv (one stacked matmul) * attention" on a
# lane tile of the fused B*Ho*Wo axis.
# -----------------------------------------------------------------------------
def _dynconv_kernel(patches_ref, w_ref, att_ref, out_ref, *, n_basis, out_planes):
    # patches_ref: (CKK, TL)       bf16 im2col patches (lanes = fused b*Ho*Wo)
    # w_ref:       (NB*CO, CKK)    bf16 basis conv weights (shared across grid)
    # att_ref:     (NB, TL)        f32 softmax attention, expanded over W_out
    # out_ref:     (CO, TL)        f32 output tile
    # Single MXU push covering all basis kernels at once (row-occupancy NB*CO).
    stacked = jnp.dot(w_ref[...], patches_ref[...],
                      preferred_element_type=jnp.float32)        # (NB*CO, TL) f32
    att = att_ref[...]                                           # (NB, TL) f32
    acc = jnp.zeros(out_ref.shape, jnp.float32)
    for n in range(n_basis):                                     # static VPU loop
        acc = acc + stacked[n * out_planes:(n + 1) * out_planes, :] * att[n:n + 1, :]
    out_ref[...] = acc.astype(out_ref.dtype)


def dynamic_conv2d_pallas(x, weight, att, *, stride, padding, lane_tile=512):
    """x: (B, C, H, W) f32; weight: (NB, CO, C, k, k) f32; att: (B, NB, H_out) f32."""
    B, C, H, W = x.shape
    NB, CO, _, k, _ = weight.shape
    Ho = (H + 2 * padding - k) // stride + 1
    Wo = (W + 2 * padding - k) // stride + 1
    HW = Ho * Wo
    CKK = C * k * k
    L = B * HW                                    # fused batch*spatial lane axis

    # Lane-tile selection: multiple of 128, pad L up to a whole number of tiles.
    if L <= lane_tile:
        TL = -(-L // 128) * 128
    else:
        TL = lane_tile
    L_pad = -(-L // TL) * TL

    # --- glue: im2col built directly in (CKK, B*HW) layout, bf16 -------------
    # Row order (c, kh, kw) matches weight.reshape(NB*CO, C*k*k); lane order is
    # (b, ho, wo).
    x_pad = jnp.pad(x, ((0, 0), (0, 0), (padding, padding), (padding, padding)))
    cols = []
    for kh in range(k):
        for kw in range(k):
            cols.append(
                x_pad[:, :,
                      kh:kh + (Ho - 1) * stride + 1:stride,
                      kw:kw + (Wo - 1) * stride + 1:stride])      # (B, C, Ho, Wo)
    patches = jnp.stack(cols, axis=0)                             # (k*k, B, C, Ho, Wo)
    patches = patches.transpose(2, 0, 1, 3, 4)                    # (C, k*k, B, Ho, Wo)
    patches = patches.reshape(CKK, L).astype(jnp.bfloat16)
    patches = jnp.pad(patches, ((0, 0), (0, L_pad - L)))

    w_flat = weight.reshape(NB * CO, CKK).astype(jnp.bfloat16)

    # attention (B, NB, Ho) -> broadcast over Wo -> (NB, B*HW), f32 (tiny array)
    att_full = jnp.broadcast_to(att[:, :, :, None], (B, NB, Ho, Wo))
    att_full = att_full.transpose(1, 0, 2, 3).reshape(NB, L).astype(jnp.float32)
    att_full = jnp.pad(att_full, ((0, 0), (0, L_pad - L)))

    kernel = functools.partial(_dynconv_kernel, n_basis=NB, out_planes=CO)
    grid = (L_pad // TL,)
    bytes_accessed = (patches.size * 2 + w_flat.size * 2
                      + att_full.size * 4 + CO * L_pad * 4)
    out2d = pl.pallas_call(
        kernel,
        out_shape=jax.ShapeDtypeStruct((CO, L_pad), x.dtype),
        grid=grid,
        in_specs=[
            pl.BlockSpec((CKK, TL), lambda i: (0, i)),            # patches tile
            pl.BlockSpec((NB * CO, CKK), lambda i: (0, 0)),       # weights (resident)
            pl.BlockSpec((NB, TL), lambda i: (0, i)),             # attention tile
        ],
        out_specs=pl.BlockSpec((CO, TL), lambda i: (0, i)),
        compiler_params=pltpu.CompilerParams(
            dimension_semantics=("parallel",),
            vmem_limit_bytes=32 * 1024 * 1024),
        cost_estimate=pl.CostEstimate(
            flops=2 * NB * CO * CKK * L_pad,
            transcendentals=0,
            bytes_accessed=bytes_accessed),
    )(patches, w_flat, att_full)

    out = out2d[:, :L].reshape(CO, B, Ho, Wo).transpose(1, 0, 2, 3)
    return out                                                    # (B, CO, Ho, Wo)


# -----------------------------------------------------------------------------
# attention2d branch (pool_dim='freq'), small -> plain JAX glue
# -----------------------------------------------------------------------------
def attention2d_freq(x, w1, bn_gamma, bn_beta, w2, b2, *, stride, padding, temperature):
    # x: (B, C, H, W);  pool over freq axis (dim 3)
    xm = jnp.mean(x, axis=3)                                      # (B, C, H)
    # Conv1d(in_planes, hidden, k, stride, padding, bias=False) along H
    y = lax.conv_general_dilated(
        xm, w1, window_strides=(stride,), padding=[(padding, padding)],
        dimension_numbers=("NCH", "OIH", "NCH"))                  # (B, hidden, H')
    # BatchNorm1d: module default is training mode -> normalize with batch stats
    # (gamma=1, beta=0 as in the PyTorch init).
    mean = jnp.mean(y, axis=(0, 2), keepdims=True)
    var = jnp.var(y, axis=(0, 2), keepdims=True)
    y = (y - mean) / jnp.sqrt(var + 1e-5)
    y = y * bn_gamma[None, :, None] + bn_beta[None, :, None]
    y = jnp.maximum(y, 0.0)                                       # ReLU
    # Conv1d(hidden, NB, 1, bias=True) == pointwise matmul
    logits = jnp.einsum("bhl,nh->bnl", y, w2[:, :, 0]) + b2[None, :, None]
    return jax.nn.softmax(logits / temperature, axis=1)           # (B, NB, H')


def dynamic_conv2d_forward(x, params, *, stride, padding, temperature):
    att = attention2d_freq(
        x, params["att_w1"], params["bn_gamma"], params["bn_beta"],
        params["att_w2"], params["att_b2"],
        stride=stride, padding=padding, temperature=temperature)
    return dynamic_conv2d_pallas(x, params["weight"], att,
                                 stride=stride, padding=padding)


# -----------------------------------------------------------------------------
# Deterministic parameter init (matches the PyTorch __init__ shapes / init style)
# -----------------------------------------------------------------------------
def init_params(key, *, in_planes, out_planes, kernel_size, n_basis_kernels):
    hidden = max(in_planes // 4, 4)
    k1, k2, k3 = jax.random.split(key, 3)
    fan_in_main = in_planes * kernel_size * kernel_size
    weight = jax.random.normal(
        k1, (n_basis_kernels, out_planes, in_planes, kernel_size, kernel_size),
        jnp.float32) * jnp.sqrt(2.0 / fan_in_main)                # kaiming normal
    att_w1 = jax.random.normal(k2, (hidden, in_planes, kernel_size),
                               jnp.float32) * jnp.sqrt(2.0 / (hidden * kernel_size))
    att_w2 = jax.random.normal(k3, (n_basis_kernels, hidden, 1),
                               jnp.float32) * jnp.sqrt(2.0 / n_basis_kernels)
    return {
        "weight": weight,
        "att_w1": att_w1,
        "bn_gamma": jnp.ones((hidden,), jnp.float32),
        "bn_beta": jnp.zeros((hidden,), jnp.float32),
        "att_w2": att_w2,
        "att_b2": jnp.zeros((n_basis_kernels,), jnp.float32),
    }


# -----------------------------------------------------------------------------
# Pure-JAX f32 reference of the dynamic-conv hot path (for verification)
# -----------------------------------------------------------------------------
def _reference(x, weight, att, *, stride, padding):
    B = x.shape[0]
    NB, CO, C, k, _ = weight.shape
    agg_w = weight.reshape(NB * CO, C, k, k)
    conv = lax.conv_general_dilated(
        x, agg_w, (stride, stride), [(padding, padding), (padding, padding)],
        dimension_numbers=("NCHW", "OIHW", "NCHW"))
    conv = conv.reshape(B, NB, CO, conv.shape[-2], conv.shape[-1])
    return jnp.sum(conv * att[:, :, None, :, None], axis=1)


if __name__ == "__main__":
    # Small config: Dynamic_conv2d(in_planes=8, out_planes=8, kernel_size=3,
    #                              stride=1, padding=1, n_basis_kernels=4,
    #                              temperature=31, pool_dim='freq')
    B, C_in, H, W = 2, 8, 16, 16
    C_out, KSZ, STRIDE, PAD, NB, TEMP = 8, 3, 1, 1, 4, 31.0

    key = jax.random.PRNGKey(0)
    kx, kp = jax.random.split(key)
    x = jax.random.normal(kx, (B, C_in, H, W), jnp.float32)
    params = init_params(kp, in_planes=C_in, out_planes=C_out,
                         kernel_size=KSZ, n_basis_kernels=NB)

    out = dynamic_conv2d_forward(x, params, stride=STRIDE, padding=PAD,
                                 temperature=TEMP)
    out = jax.block_until_ready(out)

    # verify the Pallas hot path against a pure-JAX f32 reference
    # (looser tolerance: kernel feeds the MXU bf16 patches/weights, f32 accum)
    att = attention2d_freq(x, params["att_w1"], params["bn_gamma"],
                           params["bn_beta"], params["att_w2"], params["att_b2"],
                           stride=STRIDE, padding=PAD, temperature=TEMP)
    ref = _reference(x, params["weight"], att, stride=STRIDE, padding=PAD)
    assert out.shape == (B, C_out, H, W), out.shape
    assert jnp.allclose(out, ref, atol=5e-2, rtol=5e-2), "mismatch vs reference"

    print("KERNEL_OK")
</pallas_src>

<mosaic_0001>
module attributes {stable_mosaic.version = 11 : i64} {
  func.func @_dynconv_kernel(%arg0: i32, %arg1: memref<72x512xbf16, #tpu.memory_space<vmem>>, %arg2: memref<32x72xbf16, #tpu.memory_space<vmem>>, %arg3: memref<4x512xf32, #tpu.memory_space<vmem>>, %arg4: memref<8x512xf32, #tpu.memory_space<vmem>>) attributes {dimension_semantics = [#tpu.dimension_semantics<parallel>], iteration_bounds = array<i64: 1>, scalar_prefetch = 0 : i64, scratch_operands = 0 : i64, tpu.core_type = #tpu.core_type<tc>, window_params = [{transform_indices = @transform_0, window_bounds = array<i64: 72, 512>}, {pipeline_mode = #tpu.pipeline_mode<synchronous>, transform_indices = @transform_1, window_bounds = array<i64: 32, 72>}, {transform_indices = @transform_2, window_bounds = array<i64: 4, 512>}, {transform_indices = @transform_3, window_bounds = array<i64: 8, 512>}]} {
    %c0 = arith.constant 0 : index
    %c0_0 = arith.constant 0 : index
    %0 = vector.load %arg2[%c0, %c0_0] : memref<32x72xbf16, #tpu.memory_space<vmem>>, vector<32x72xbf16>
    %c0_1 = arith.constant 0 : index
    %c0_2 = arith.constant 0 : index
    %1 = vector.load %arg1[%c0_1, %c0_2] : memref<72x512xbf16, #tpu.memory_space<vmem>>, vector<72x512xbf16>
    %cst = arith.constant dense<0.000000e+00> : vector<32x512xf32>
    %2 = tpu.matmul %0, %1, %cst {dimension_numbers = #tpu.dot_dimension_numbers<[1], [0], [0], [1], [0, 0, 1, 1], [], []>} : vector<32x72xbf16>, vector<72x512xbf16>, vector<32x512xf32> -> vector<32x512xf32>
    %c0_3 = arith.constant 0 : index
    %c0_4 = arith.constant 0 : index
    %3 = vector.load %arg3[%c0_3, %c0_4] : memref<4x512xf32, #tpu.memory_space<vmem>>, vector<4x512xf32>
    %cst_5 = arith.constant 0.000000e+00 : f32
    %4 = vector.broadcast %cst_5 : f32 to vector<8x512xf32>
    %5 = vector.extract_strided_slice %2 {offsets = [0, 0], sizes = [8, 512], strides = [1, 1]} : vector<32x512xf32> to vector<8x512xf32>
    %6 = vector.extract_strided_slice %3 {offsets = [0, 0], sizes = [1, 512], strides = [1, 1]} : vector<4x512xf32> to vector<1x512xf32>
    %7 = vector.broadcast %6 : vector<1x512xf32> to vector<8x512xf32>
    %8 = arith.mulf %5, %7 : vector<8x512xf32>
    %9 = arith.addf %4, %8 : vector<8x512xf32>
    %10 = vector.extract_strided_slice %2 {offsets = [8, 0], sizes = [8, 512], strides = [1, 1]} : vector<32x512xf32> to vector<8x512xf32>
    %11 = vector.extract_strided_slice %3 {offsets = [1, 0], sizes = [1, 512], strides = [1, 1]} : vector<4x512xf32> to vector<1x512xf32>
    %12 = vector.broadcast %11 : vector<1x512xf32> to vector<8x512xf32>
    %13 = arith.mulf %10, %12 : vector<8x512xf32>
    %14 = arith.addf %9, %13 : vector<8x512xf32>
    %15 = vector.extract_strided_slice %2 {offsets = [16, 0], sizes = [8, 512], strides = [1, 1]} : vector<32x512xf32> to vector<8x512xf32>
    %16 = vector.extract_strided_slice %3 {offsets = [2, 0], sizes = [1, 512], strides = [1, 1]} : vector<4x512xf32> to vector<1x512xf32>
    %17 = vector.broadcast %16 : vector<1x512xf32> to vector<8x512xf32>
    %18 = arith.mulf %15, %17 : vector<8x512xf32>
    %19 = arith.addf %14, %18 : vector<8x512xf32>
    %20 = vector.extract_strided_slice %2 {offsets = [24, 0], sizes = [8, 512], strides = [1, 1]} : vector<32x512xf32> to vector<8x512xf32>
    %21 = vector.extract_strided_slice %3 {offsets = [3, 0], sizes = [1, 512], strides = [1, 1]} : vector<4x512xf32> to vector<1x512xf32>
    %22 = vector.broadcast %21 : vector<1x512xf32> to vector<8x512xf32>
    %23 = arith.mulf %20, %22 : vector<8x512xf32>
    %24 = arith.addf %19, %23 : vector<8x512xf32>
    %c0_6 = arith.constant 0 : index
    %c0_7 = arith.constant 0 : index
    %25 = vector.load %arg4[%c0_6, %c0_7] : memref<8x512xf32, #tpu.memory_space<vmem>>, vector<8x512xf32>
    tpu.vector_store %arg4[%c0_6, %c0_7], %24 {strides = array<i32>} : memref<8x512xf32, #tpu.memory_space<vmem>>, vector<8x512xf32>,
    return
  }
  func.func @transform_0(%arg0: i32) -> (i32, i32) {
    %c0_i32 = arith.constant 0 : i32
    %c0_i32_0 = arith.constant 0 : i32
    return %c0_i32, %arg0 : i32, i32
  }
  func.func @transform_1(%arg0: i32) -> (i32, i32) {
    %c0_i32 = arith.constant 0 : i32
    %c0_i32_0 = arith.constant 0 : i32
    %c0_i32_1 = arith.constant 0 : i32
    return %c0_i32, %c0_i32_0 : i32, i32
  }
  func.func @transform_2(%arg0: i32) -> (i32, i32) {
    %c0_i32 = arith.constant 0 : i32
    %c0_i32_0 = arith.constant 0 : i32
    return %c0_i32, %arg0 : i32, i32
  }
  func.func @transform_3(%arg0: i32) -> (i32, i32) {
    %c0_i32 = arith.constant 0 : i32
    %c0_i32_0 = arith.constant 0 : i32
    return %c0_i32, %arg0 : i32, i32
  }
}

</mosaic_0001>

<llo_original>
// kernel: tpu_custom_call.1
$region0: #{tpu_custom_call.1}
  #allocation0 [shape = 'u32[]', space=smem, size = 0x4, offset = 0x4, fixed_abs, tag = 'smem constant byte address 0x4 - core index']
  #allocation1 [shape = 'u32[144,128]{1,0:T(1,128)}', space=vmem, size = 0x12000, scoped, tag = 'internal scratch']
  %s0 = inlined_call_operand.hbm [shape: bf16[72,512], index: 0, kind: input, shape index: {}]
  %s1 = inlined_call_operand.hbm [shape: bf16[32,72], index: 1, kind: input, shape index: {}]
  %s2 = inlined_call_operand.hbm [shape: f32[4,512], index: 2, kind: input, shape index: {}]
  %s3 = inlined_call_operand.hbm [shape: f32[8,512], index: 3, kind: output, shape index: {}]
  %s4 = sld [smem:[#allocation0]]
  $region34: #{tpu_custom_call.1} parent=0
    _
  %s6 = ssub.s32 1, %s4
  %s7 = scalar_select 0, %s6, %s4
  $region1: #{tpu_custom_call.1} parent=0
    #allocation2 [shape = 'u8[73728]{0}', space=vmem, size = 0x12000, scoped, tag = 'input window, operand 0, single buffered']
    #allocation3 [shape = 's32[1]{0}', space=sflag, size = 0x4, scoped, tag = 'scoped memory for tpu_custom_call.1']
    #allocation4 [shape = 's32[1]{0}', space=sflag, size = 0x4, scoped, tag = 'scoped memory for tpu_custom_call.1']
    #allocation5 [shape = 'u8[8192]{0}', space=vmem, size = 0x2000, scoped, tag = 'input window, operand 1, single buffered']
    #allocation6 [shape = 's32[1]{0}', space=sflag, size = 0x4, scoped, tag = 'scoped memory for tpu_custom_call.1']
    #allocation7 [shape = 'u8[8192]{0}', space=vmem, size = 0x2000, scoped, tag = 'input window, operand 2, single buffered']
    #allocation8 [shape = 'u8[16384]{0}', space=vmem, size = 0x4000, scoped, tag = 'output window, operand 0, single buffered']
    %8 = vsyncpa [#allocation3], 0
    %9 = vsyncpa [#allocation6], 0
    %10 = vsyncpa [#allocation4], 0
    // Predicated region
    $region2: #{tpu_custom_call.1} parent=1 // pred_check
      _
    $region3: #{tpu_custom_call.1} parent=1 // pred_check_branch
      %12 = sbr.rel (0) target = $region5
    $region4: #{tpu_custom_call.1} parent=1 // pred_region
      %s14 = ssub.s32 2304, 2304
      %15 = vsyncadd [#allocation3], %s14
      %s16 = sshll.u32 [#allocation2], 4
      %s17 = int_to_ptr.vmem [resolvable:$true] %s16
      %22 = dma.hbm_to_vmem [thread:$0]  %s0, 2304, %s17, [#allocation3], 256, 256, 16
    $region5: #{tpu_custom_call.1} parent=1 // pred_fallthru
      _
    // Predicated region
    $region6: #{tpu_custom_call.1} parent=1 // pred_check
      _
    $region7: #{tpu_custom_call.1} parent=1 // pred_check_branch
      %24 = sbr.rel (0) target = $region9
    $region8: #{tpu_custom_call.1} parent=1 // pred_region
      %s26 = ssub.s32 256, 256
      %27 = vsyncadd [#allocation6], %s26
      %s28 = sshll.u32 [#allocation5], 4
      %s29 = int_to_ptr.vmem [resolvable:$true] %s28
      %34 = dma.hbm_to_vmem [thread:$0]  %s1, 256, %s29, [#allocation6], 64, 64, 4
    $region9: #{tpu_custom_call.1} parent=1 // pred_fallthru
      _
    // Predicated region
    $region10: #{tpu_custom_call.1} parent=1 // pred_check
      _
    $region11: #{tpu_custom_call.1} parent=1 // pred_check_branch
      %36 = sbr.rel (0) target = $region13
    $region12: #{tpu_custom_call.1} parent=1 // pred_region
      %s38 = ssub.s32 256, 256
      %39 = vsyncadd [#allocation6], %s38
      %s41 = sshll.u32 [#allocation7], 4
      %s42 = int_to_ptr.vmem [resolvable:$true] %s41
      %44 = dma.hbm_to_vmem [thread:$0]  %s2, 256, %s42, [#allocation6]
    $region13: #{tpu_custom_call.1} parent=1 // pred_fallthru
      _
    // Predicated region
    $region14: #{tpu_custom_call.1} parent=1 // pred_check
      _
    $region15: #{tpu_custom_call.1} parent=1 // pred_check_branch
      %46 = sbr.rel (0) target = $region17
    $region16: #{tpu_custom_call.1} parent=1 // pred_region
      %47 = dma.done [#allocation3], 2304
    $region17: #{tpu_custom_call.1} parent=1 // pred_fallthru
      _
    // Predicated region
    $region18: #{tpu_custom_call.1} parent=1 // pred_check
      _
    $region19: #{tpu_custom_call.1} parent=1 // pred_check_branch
      %49 = sbr.rel (0) target = $region21
    $region20: #{tpu_custom_call.1} parent=1 // pred_region
      %50 = dma.done [#allocation6], 256
    $region21: #{tpu_custom_call.1} parent=1 // pred_fallthru
      _
    // Predicated region
    $region22: #{tpu_custom_call.1} parent=1 // pred_check
      _
    $region23: #{tpu_custom_call.1} parent=1 // pred_check_branch
      %52 = sbr.rel (0) target = $region25
    $region24: #{tpu_custom_call.1} parent=1 // pred_region
      %53 = dma.done [#allocation6], 256
    $region25: #{tpu_custom_call.1} parent=1 // pred_fallthru
      _
    %v55 = vld [vmem:[#allocation5] sm:$0xf]
    %v56 = vld [vmem:[#allocation5 + $0x4] sm:$0xf]
    %v57 = vld [vmem:[#allocation5 + $0x8] sm:$0xf]
    %v58 = vld [vmem:[#allocation5 + $0xc] sm:$0xf]
    %v59 = vld [vmem:[#allocation2] sm:$0xff]
    %v60 = vld [vmem:[#allocation2 + $0x8] sm:$0xff]
    %v61 = vld [vmem:[#allocation2 + $0x10] sm:$0xff]
    %v62 = vld [vmem:[#allocation2 + $0x18] sm:$0xff]
    %v63 = vld [vmem:[#allocation2 + $0x20] sm:$0xff]
    %v64 = vld [vmem:[#allocation2 + $0x28] sm:$0xff]
    %v65 = vld [vmem:[#allocation2 + $0x30] sm:$0xff]
    %v66 = vld [vmem:[#allocation2 + $0x38] sm:$0xff]
    %v67 = vld [vmem:[#allocation2 + $0x40] sm:$0xff]
    %v68 = vld [vmem:[#allocation2 + $0x48] sm:$0xff]
    %v69 = vld [vmem:[#allocation2 + $0x50] sm:$0xff]
    %v70 = vld [vmem:[#allocation2 + $0x58] sm:$0xff]
    %v71 = vld [vmem:[#allocation2 + $0x60] sm:$0xff]
    %v72 = vld [vmem:[#allocation2 + $0x68] sm:$0xff]
    %v73 = vld [vmem:[#allocation2 + $0x70] sm:$0xff]
    %v74 = vld [vmem:[#allocation2 + $0x78] sm:$0xff]
    %v75 = vld [vmem:[#allocation2 + $0x80] sm:$0xff]
    %v76 = vld [vmem:[#allocation2 + $0x88] sm:$0xff]
    %v81 = vunpack.c.l.b16 %v55
    %v82 = vunpack.c.l.b16 %v56
    %v83 = vunpack.c.l.b16 %v57
    %v84 = vunpack.c.l.b16 %v58
    %v85 = vpack.c.b16 %v82, %v81
    %v86 = vpack.c.b16 %v84, %v83
    %v105 = vunpack.c.l.b16 %v59
    %v106 = vunpack.c.h.b16 %v59
    %v107 = vunpack.c.l.b16 %v60
    %v108 = vunpack.c.h.b16 %v60
    %v109 = vunpack.c.l.b16 %v61
    %v110 = vunpack.c.h.b16 %v61
    %v111 = vunpack.c.l.b16 %v62
    %v112 = vunpack.c.h.b16 %v62
    %v113 = vunpack.c.l.b16 %v63
    %v114 = vunpack.c.h.b16 %v63
    %v115 = vunpack.c.l.b16 %v64
    %v116 = vunpack.c.h.b16 %v64
    %v117 = vunpack.c.l.b16 %v65
    %v118 = vunpack.c.h.b16 %v65
    %v119 = vunpack.c.l.b16 %v66
    %v120 = vunpack.c.h.b16 %v66
    %v121 = vunpack.c.l.b16 %v67
    %v122 = vunpack.c.h.b16 %v67
    %v123 = vunpack.c.l.b16 %v68
    %v124 = vunpack.c.h.b16 %v68
    %v125 = vunpack.c.l.b16 %v69
    %v126 = vunpack.c.h.b16 %v69
    %v127 = vunpack.c.l.b16 %v70
    %v128 = vunpack.c.h.b16 %v70
    %v129 = vunpack.c.l.b16 %v71
    %v130 = vunpack.c.h.b16 %v71
    %v131 = vunpack.c.l.b16 %v72
    %v132 = vunpack.c.h.b16 %v72
    %v133 = vunpack.c.l.b16 %v73
    %v134 = vunpack.c.h.b16 %v73
    %v135 = vunpack.c.l.b16 %v74
    %v136 = vunpack.c.h.b16 %v74
    %v137 = vunpack.c.l.b16 %v75
    %v138 = vunpack.c.h.b16 %v75
    %v139 = vunpack.c.l.b16 %v76
    %v140 = vunpack.c.h.b16 %v76
    %v141 = vpack.c.b16 %v109, %v105
    %v142 = vpack.c.b16 %v110, %v106
    %v143 = vpack.c.b16 %v111, %v107
    %v144 = vpack.c.b16 %v112, %v108
    %v145 = vpack.c.b16 %v117, %v113
    %v146 = vpack.c.b16 %v118, %v114
    %v147 = vpack.c.b16 %v119, %v115
    %v148 = vpack.c.b16 %v120, %v116
    %v149 = vpack.c.b16 %v125, %v121
    %v150 = vpack.c.b16 %v126, %v122
    %v151 = vpack.c.b16 %v127, %v123
    %v152 = vpack.c.b16 %v128, %v124
    %v153 = vpack.c.b16 %v133, %v129
    %v154 = vpack.c.b16 %v134, %v130
    %v155 = vpack.c.b16 %v135, %v131
    %v156 = vpack.c.b16 %v136, %v132
    %v157 = vpack.c.b16 %v137, %v137
    %v158 = vpack.c.b16 %v138, %v138
    %v159 = vpack.c.b16 %v139, %v139
    %v160 = vpack.c.b16 %v140, %v140
    %vm177 = vcmask 588800
    %v179 = vsel %vm177, %v85, 0
    %v182 = vsel %vm177, %v86, 0
    %vm184 = vcmask 1043456
    %v186 = vsel %vm184, %v157, 0
    %v189 = vsel %vm184, %v158, 0
    %v192 = vsel %vm184, %v159, 0
    %v195 = vsel %vm184, %v160, 0
    %197 = vmatprep.subr.bf16.mxu0 %v142
    %198 = vmatpush1.bf16.msra.mxu0 %v141
    %199 = vmatprep.subr.bf16.mxu0 %v146
    %200 = vmatpush1.bf16.msra.mxu0 %v145
    %201 = vmatprep.subr.bf16.mxu0 %v150
    %202 = vmatpush1.bf16.msra.mxu0 %v149
    %203 = vmatprep.subr.bf16.mxu0 %v154
    %204 = vmatpush1.bf16.msra.mxu0 %v153
    %205 = vmatprep.subr.bf16.mxu0 %v189
    %206 = vmatpush1.bf16.msra.mxu0 %v186
    %207 = vmatprep.subr.bf16.mxu0 0
    %208 = vmatpush1.bf16.msra.mxu0 0
    %209 = vmatprep.subr.bf16.mxu0 0
    %210 = vmatpush1.bf16.msra.mxu0 0
    %211 = vmatprep.subr.bf16.mxu0 0
    %212 = vmatpush1.bf16.msra.mxu0 0
    %213 = vmatprep.subr.bf16.mxu0 0
    %214 = vmatpush1.bf16.msra.mxu0 0
    %215 = vmatprep.subr.bf16.mxu0 0
    %216 = vmatpush1.bf16.msra.mxu0 0
    %217 = vmatprep.subr.bf16.mxu0 0
    %218 = vmatpush1.bf16.msra.mxu0 0
    %219 = vmatprep.subr.bf16.mxu0 0
    %220 = vmatpush1.bf16.msra.mxu0 0
    %221 = vmatprep.subr.bf16.mxu0 0
    %222 = vmatpush1.bf16.msra.mxu0 0
    %223 = vmatprep.subr.bf16.mxu0 0
    %224 = vmatpush1.bf16.msra.mxu0 0
    %225 = vmatprep.subr.bf16.mxu0 0
    %226 = vmatpush1.bf16.msra.mxu0 0
    %227 = vmatprep.subr.bf16.mxu0 0
    %228 = vmatpush1.bf16.msra.mxu0 0
    %229 = vmatprep.mubr.bf16.mxu0 0
    %230 = vmatmul.mubr.bf16.gmra.mrb[0].mxu0 %v179
    %v231 = vpop.f32.mrb[0].mxu0
    %v232 = vadd.f32 0.0, %v231
    %v233 = vpop.f32.mrb[0].mxu0
    %v234 = vadd.f32 0.0, %v233
    %v235 = vpop.f32.mrb[0].mxu0
    %v236 = vadd.f32 0.0, %v235
    %v237 = vpop.f32.mrb[0].mxu0
    %v238 = vadd.f32 0.0, %v237
    %239 = vmatprep.mubr.bf16.mxu0 0
    %240 = vmatmul.mubr.bf16.gmra.mrb[0].mxu0 %v182
    %v241 = vpop.f32.mrb[0].mxu0
    %v242 = vadd.f32 0.0, %v241
    %v243 = vpop.f32.mrb[0].mxu0
    %v244 = vadd.f32 0.0, %v243
    %v245 = vpop.f32.mrb[0].mxu0
    %v246 = vadd.f32 0.0, %v245
    %v247 = vpop.f32.mrb[0].mxu0
    %v248 = vadd.f32 0.0, %v247
    %249 = vdwg.mxu0
    %250 = vmatprep.subr.bf16.mxu0 %v144
    %251 = vmatpush1.bf16.msra.mxu0 %v143
    %252 = vmatprep.subr.bf16.mxu0 %v148
    %253 = vmatpush1.bf16.msra.mxu0 %v147
    %254 = vmatprep.subr.bf16.mxu0 %v152
    %255 = vmatpush1.bf16.msra.mxu0 %v151
    %256 = vmatprep.subr.bf16.mxu0 %v156
    %257 = vmatpush1.bf16.msra.mxu0 %v155
    %258 = vmatprep.subr.bf16.mxu0 %v195
    %259 = vmatpush1.bf16.msra.mxu0 %v192
    %260 = vmatprep.subr.bf16.mxu0 0
    %261 = vmatpush1.bf16.msra.mxu0 0
    %262 = vmatprep.subr.bf16.mxu0 0
    %263 = vmatpush1.bf16.msra.mxu0 0
    %264 = vmatprep.subr.bf16.mxu0 0
    %265 = vmatpush1.bf16.msra.mxu0 0
    %266 = vmatprep.subr.bf16.mxu0 0
    %267 = vmatpush1.bf16.msra.mxu0 0
    %268 = vmatprep.subr.bf16.mxu0 0
    %269 = vmatpush1.bf16.msra.mxu0 0
    %270 = vmatprep.subr.bf16.mxu0 0
    %271 = vmatpush1.bf16.msra.mxu0 0
    %272 = vmatprep.subr.bf16.mxu0 0
    %273 = vmatpush1.bf16.msra.mxu0 0
    %274 = vmatprep.subr.bf16.mxu0 0
    %275 = vmatpush1.bf16.msra.mxu0 0
    %276 = vmatprep.subr.bf16.mxu0 0
    %277 = vmatpush1.bf16.msra.mxu0 0
    %278 = vmatprep.subr.bf16.mxu0 0
    %279 = vmatpush1.bf16.msra.mxu0 0
    %280 = vmatprep.subr.bf16.mxu0 0
    %281 = vmatpush1.bf16.msra.mxu0 0
    %282 = vmatprep.mubr.bf16.mxu0 0
    %283 = vmatmul.mubr.bf16.gmra.mrb[0].mxu0 %v179
    %v284 = vpop.f32.mrb[0].mxu0
    %v285 = vadd.f32 0.0, %v284
    %v286 = vpop.f32.mrb[0].mxu0
    %v287 = vadd.f32 0.0, %v286
    %v288 = vpop.f32.mrb[0].mxu0
    %v289 = vadd.f32 0.0, %v288
    %v290 = vpop.f32.mrb[0].mxu0
    %v291 = vadd.f32 0.0, %v290
    %292 = vmatprep.mubr.bf16.mxu0 0
    %293 = vmatmul.mubr.bf16.gmra.mrb[0].mxu0 %v182
    %v294 = vpop.f32.mrb[0].mxu0
    %v295 = vadd.f32 0.0, %v294
    %v296 = vpop.f32.mrb[0].mxu0
    %v297 = vadd.f32 0.0, %v296
    %v298 = vpop.f32.mrb[0].mxu0
    %v299 = vadd.f32 0.0, %v298
    %v300 = vpop.f32.mrb[0].mxu0
    %v301 = vadd.f32 0.0, %v300
    %302 = vdwg.mxu0
    %v303 = vld [vmem:[#allocation7] sm:$0xff]
    %v304 = vld [vmem:[#allocation7 + $0x8] sm:$0xff]
    %v307 = vlaneseq
    %v308 = vshrl.u32 %v307, 7
    %v309 = vsub.s32 0, %v308
    %v310 = vrot.slane %v303, %v309
    %v311 = vlaneseq
    %v312 = vshrl.u32 %v311, 7
    %v313 = vsub.s32 4, %v312
    %v314 = vrot.slane %v303, %v313
    %v315 = vlaneseq
    %v316 = vshrl.u32 %v315, 7
    %v317 = vsub.s32 0, %v316
    %v318 = vrot.slane %v304, %v317
    %v319 = vlaneseq
    %v320 = vshrl.u32 %v319, 7
    %v321 = vsub.s32 4, %v320
    %v322 = vrot.slane %v304, %v321
    %v327 = vlaneseq
    %v328 = vshrl.u32 %v327, 7
    %v329 = vsub.s32 0, %v328
    %v330 = vrot.slane %v310, %v329
    %v331 = vlaneseq
    %v332 = vshrl.u32 %v331, 7
    %v333 = vsub.s32 0, %v332
    %v334 = vrot.slane %v314, %v333
    %v335 = vlaneseq
    %v336 = vshrl.u32 %v335, 7
    %v337 = vsub.s32 0, %v336
    %v338 = vrot.slane %v318, %v337
    %v339 = vlaneseq
    %v340 = vshrl.u32 %v339, 7
    %v341 = vsub.s32 0, %v340
    %v342 = vrot.slane %v322, %v341
    %v343 = vmul.f32 %v232, %v330
    %v344 = vmul.f32 %v234, %v334
    %v345 = vmul.f32 %v285, %v338
    %v346 = vmul.f32 %v287, %v342
    %v347 = vadd.f32 %v343, 0.0
    %v348 = vadd.f32 %v344, 0.0
    %v349 = vadd.f32 %v345, 0.0
    %v350 = vadd.f32 %v346, 0.0
    %v351 = vlaneseq
    %v352 = vshrl.u32 %v351, 7
    %v353 = vsub.s32 1, %v352
    %v354 = vrot.slane %v303, %v353
    %v355 = vlaneseq
    %v356 = vshrl.u32 %v355, 7
    %v357 = vsub.s32 5, %v356
    %v358 = vrot.slane %v303, %v357
    %v359 = vlaneseq
    %v360 = vshrl.u32 %v359, 7
    %v361 = vsub.s32 1, %v360
    %v362 = vrot.slane %v304, %v361
    %v363 = vlaneseq
    %v364 = vshrl.u32 %v363, 7
    %v365 = vsub.s32 5, %v364
    %v366 = vrot.slane %v304, %v365
    %v371 = vlaneseq
    %v372 = vshrl.u32 %v371, 7
    %v373 = vsub.s32 1, %v372
    %v374 = vrot.slane %v354, %v373
    %v375 = vlaneseq
    %v376 = vshrl.u32 %v375, 7
    %v377 = vsub.s32 1, %v376
    %v378 = vrot.slane %v358, %v377
    %v379 = vlaneseq
    %v380 = vshrl.u32 %v379, 7
    %v381 = vsub.s32 1, %v380
    %v382 = vrot.slane %v362, %v381
    %v383 = vlaneseq
    %v384 = vshrl.u32 %v383, 7
    %v385 = vsub.s32 1, %v384
    %v386 = vrot.slane %v366, %v385
    %v387 = vmul.f32 %v236, %v374
    %v388 = vmul.f32 %v238, %v378
    %v389 = vmul.f32 %v289, %v382
    %v390 = vmul.f32 %v291, %v386
    %v391 = vadd.f32 %v347, %v387
    %v392 = vadd.f32 %v348, %v388
    %v393 = vadd.f32 %v349, %v389
    %v394 = vadd.f32 %v350, %v390
    %v395 = vlaneseq
    %v396 = vshrl.u32 %v395, 7
    %v397 = vsub.s32 2, %v396
    %v398 = vrot.slane %v303, %v397
    %v399 = vlaneseq
    %v400 = vshrl.u32 %v399, 7
    %v401 = vsub.s32 6, %v400
    %v402 = vrot.slane %v303, %v401
    %v403 = vlaneseq
    %v404 = vshrl.u32 %v403, 7
    %v405 = vsub.s32 2, %v404
    %v406 = vrot.slane %v304, %v405
    %v407 = vlaneseq
    %v408 = vshrl.u32 %v407, 7
    %v409 = vsub.s32 6, %v408
    %v410 = vrot.slane %v304, %v409
    %v415 = vlaneseq
    %v416 = vshrl.u32 %v415, 7
    %v417 = vsub.s32 2, %v416
    %v418 = vrot.slane %v398, %v417
    %v419 = vlaneseq
    %v420 = vshrl.u32 %v419, 7
    %v421 = vsub.s32 2, %v420
    %v422 = vrot.slane %v402, %v421
    %v423 = vlaneseq
    %v424 = vshrl.u32 %v423, 7
    %v425 = vsub.s32 2, %v424
    %v426 = vrot.slane %v406, %v425
    %v427 = vlaneseq
    %v428 = vshrl.u32 %v427, 7
    %v429 = vsub.s32 2, %v428
    %v430 = vrot.slane %v410, %v429
    %v431 = vmul.f32 %v242, %v418
    %v432 = vmul.f32 %v244, %v422
    %v433 = vmul.f32 %v295, %v426
    %v434 = vmul.f32 %v297, %v430
    %v435 = vadd.f32 %v391, %v431
    %v436 = vadd.f32 %v392, %v432
    %v437 = vadd.f32 %v393, %v433
    %v438 = vadd.f32 %v394, %v434
    %v439 = vlaneseq
    %v440 = vshrl.u32 %v439, 7
    %v441 = vsub.s32 3, %v440
    %v442 = vrot.slane %v303, %v441
    %v443 = vlaneseq
    %v444 = vshrl.u32 %v443, 7
    %v445 = vsub.s32 7, %v444
    %v446 = vrot.slane %v303, %v445
    %v447 = vlaneseq
    %v448 = vshrl.u32 %v447, 7
    %v449 = vsub.s32 3, %v448
    %v450 = vrot.slane %v304, %v449
    %v451 = vlaneseq
    %v452 = vshrl.u32 %v451, 7
    %v453 = vsub.s32 7, %v452
    %v454 = vrot.slane %v304, %v453
    %v459 = vlaneseq
    %v460 = vshrl.u32 %v459, 7
    %v461 = vsub.s32 3, %v460
    %v462 = vrot.slane %v442, %v461
    %v463 = vlaneseq
    %v464 = vshrl.u32 %v463, 7
    %v465 = vsub.s32 3, %v464
    %v466 = vrot.slane %v446, %v465
    %v467 = vlaneseq
    %v468 = vshrl.u32 %v467, 7
    %v469 = vsub.s32 3, %v468
    %v470 = vrot.slane %v450, %v469
    %v471 = vlaneseq
    %v472 = vshrl.u32 %v471, 7
    %v473 = vsub.s32 3, %v472
    %v474 = vrot.slane %v454, %v473
    %v475 = vmul.f32 %v246, %v462
    %v476 = vmul.f32 %v248, %v466
    %v477 = vmul.f32 %v299, %v470
    %v478 = vmul.f32 %v301, %v474
    %v479 = vadd.f32 %v435, %v475
    %v480 = vadd.f32 %v436, %v476
    %v481 = vadd.f32 %v437, %v477
    %v482 = vadd.f32 %v438, %v478
    %483 = vst [vmem:[#allocation8] sm:$0xff] %v479
    %484 = vst [vmem:[#allocation8 + $0x8] sm:$0xff] %v480
    %485 = vst [vmem:[#allocation8 + $0x10] sm:$0xff] %v481
    %486 = vst [vmem:[#allocation8 + $0x18] sm:$0xff] %v482
    // Predicated region
    $region26: #{tpu_custom_call.1} parent=1 // pred_check
      _
    $region27: #{tpu_custom_call.1} parent=1 // pred_check_branch
      %488 = sbr.rel (0) target = $region29
    $region28: #{tpu_custom_call.1} parent=1 // pred_region
      %s490 = ssub.s32 512, 512
      %491 = vsyncadd [#allocation4], %s490
      %s493 = sshll.u32 [#allocation8], 4
      %s494 = int_to_ptr.vmem [resolvable:$true] %s493
      %496 = dma.vmem_to_hbm [thread:$0]  %s494, 512, %s3, [#allocation4]
    $region29: #{tpu_custom_call.1} parent=1 // pred_fallthru
      _
    // Predicated region
    $region30: #{tpu_custom_call.1} parent=1 // pred_check
      _
    $region31: #{tpu_custom_call.1} parent=1 // pred_check_branch
      %498 = sbr.rel (0) target = $region33
    $region32: #{tpu_custom_call.1} parent=1 // pred_region
      %499 = dma.done [#allocation4], 512
    $region33: #{tpu_custom_call.1} parent=1 // pred_fallthru
      _
    %500 = vsyncpa [#allocation3], 1
    %501 = vsyncpa [#allocation6], 1
    %502 = vsyncpa [#allocation4], 1

</llo_original>
